<compile_context>
chip_gen: v6e
topology: v6e:2x2x1
jax: 0.10.0
libtpu: 0.0.40
codegen_flags: <defaults>
</compile_context>

<pallas_src>
import functools

import jax
import jax.numpy as jnp
from jax.experimental import pallas as pl
from jax.experimental.pallas import tpu as pltpu

LN_EPS = 1e-5  # torch.nn.LayerNorm default

_ROW_ALIGN = 32                       # multiple of 8 (f32) and 16 (bf16) sublanes
_TILE_VMEM_BUDGET = 40 * 1024 * 1024  # bytes available for pipeline buffers
_VMEM_LIMIT_BYTES = 56 * 1024 * 1024  # below v7x physical 64 MiB


def _round_up(x, m):
    return ((x + m - 1) // m) * m


def _pick_row_tile(rows, in_dim, embed_dim, x_itemsize, out_itemsize, requested):
    """Largest aligned row tile (<= requested) whose buffers fit the VMEM budget."""
    rt = min(_round_up(requested, _ROW_ALIGN), _round_up(rows, _ROW_ALIGN))
    rt = max(rt, _ROW_ALIGN)

    def vmem_bytes(t):
        x_buf = 2 * t * in_dim * x_itemsize           # x tile, double-buffered
        o_buf = 2 * t * embed_dim * out_itemsize      # out tile, double-buffered
        w_buf = 2 * in_dim * embed_dim * x_itemsize   # weight (constant index, 2 bufs)
        p_buf = 2 * 3 * embed_dim * 4                 # fused bias/gamma/beta
        tmp = 2 * t * embed_dim * 4                   # f32 LayerNorm temporaries
        return x_buf + o_buf + w_buf + p_buf + tmp

    while rt > _ROW_ALIGN and vmem_bytes(rt) > _TILE_VMEM_BUDGET:
        rt -= _ROW_ALIGN
    return rt


def _embed_kernel(x_ref, w_ref, p_ref, o_ref):
    """One row tile: Linear -> LayerNorm (affine). All math in f32."""
    # Linear: (row_tile, in_dim) @ (in_dim, embed_dim) -> f32 accumulation on MXU.
    h = jnp.dot(x_ref[...], w_ref[...], preferred_element_type=jnp.float32)

    p = p_ref[...].astype(jnp.float32)  # (3, embed_dim): [bias, gamma, beta]
    h = h + p[0:1, :]

    # LayerNorm over the feature (lane) axis — biased variance, eps inside rsqrt.
    mean = jnp.mean(h, axis=-1, keepdims=True)
    centered = h - mean
    var = jnp.mean(centered * centered, axis=-1, keepdims=True)
    inv_std = jax.lax.rsqrt(var + LN_EPS)

    o_ref[...] = ((centered * inv_std) * p[1:2, :] + p[2:3, :]).astype(o_ref.dtype)


@functools.partial(jax.jit, static_argnames=("row_tile_hint", "use_bf16"))
def embed_model_forward(x, w, b, gamma, beta, *, row_tile_hint=512, use_bf16=False):
    """EmbeddingModel.forward: (B, S, in_dim) -> (B, S, embed_dim)."""
    B, S, in_dim = x.shape
    embed_dim = w.shape[1]
    out_dtype = x.dtype
    rows = B * S

    # Optional bf16 storage for the two big HBM streams (x, W); compute stays f32.
    stream_dtype = jnp.bfloat16 if use_bf16 else x.dtype
    x2d = x.reshape(rows, in_dim).astype(stream_dtype)
    w_c = w.astype(stream_dtype)

    # Fuse bias / gamma / beta into a single (3, embed_dim) slab (one buffer).
    params3 = jnp.stack(
        [b.astype(jnp.float32), gamma.astype(jnp.float32), beta.astype(jnp.float32)],
        axis=0,
    )

    row_tile = _pick_row_tile(
        rows,
        in_dim,
        embed_dim,
        jnp.dtype(stream_dtype).itemsize,
        jnp.dtype(out_dtype).itemsize,
        row_tile_hint,
    )
    padded_rows = _round_up(rows, row_tile)
    if padded_rows != rows:
        x2d = jnp.pad(x2d, ((0, padded_rows - rows), (0, 0)))

    out2d = pl.pallas_call(
        _embed_kernel,
        out_shape=jax.ShapeDtypeStruct((padded_rows, embed_dim), out_dtype),
        grid_spec=pltpu.PrefetchScalarGridSpec(
            num_scalar_prefetch=0,
            grid=(padded_rows // row_tile,),
            in_specs=[
                pl.BlockSpec((row_tile, in_dim), lambda i: (i, 0)),
                # Constant block index: weight is DMA'd once per core and reused.
                pl.BlockSpec((in_dim, embed_dim), lambda i: (0, 0)),
                pl.BlockSpec((3, embed_dim), lambda i: (0, 0)),
            ],
            out_specs=pl.BlockSpec((row_tile, embed_dim), lambda i: (i, 0)),
        ),
        compiler_params=pltpu.CompilerParams(
            dimension_semantics=("parallel",),
            vmem_limit_bytes=_VMEM_LIMIT_BYTES,
        ),
    )(x2d, w_c, params3)

    if padded_rows != rows:
        out2d = out2d[:rows]
    return out2d.reshape(B, S, embed_dim)


def base_embedder_forward(batch, params, in_dim, embed_dim, *, use_bf16=False):
    """BaseEmbedder.forward."""
    inputs_key = "inputs" if "inputs_embeds" not in batch else "inputs_embeds"
    x = batch[inputs_key]
    if in_dim == embed_dim:
        return x
    return embed_model_forward(
        x,
        params["w"],
        params["b"],
        params["gamma"],
        params["beta"],
        use_bf16=use_bf16,
    )


def init_params(key, in_dim, embed_dim):
    """Deterministic init mirroring torch Linear + LayerNorm param shapes."""
    k_w, k_b = jax.random.split(key)
    bound = 1.0 / jnp.sqrt(in_dim)
    # Stored as (in_dim, embed_dim) == torch weight (embed_dim, in_dim) transposed.
    w = jax.random.uniform(k_w, (in_dim, embed_dim), jnp.float32, -bound, bound)
    b = jax.random.uniform(k_b, (embed_dim,), jnp.float32, -bound, bound)
    gamma = jnp.ones((embed_dim,), jnp.float32)
    beta = jnp.zeros((embed_dim,), jnp.float32)
    return {"w": w, "b": b, "gamma": gamma, "beta": beta}


def _reference(x, params):
    h = jnp.einsum("bse,ed->bsd", x, params["w"]) + params["b"]
    mean = jnp.mean(h, axis=-1, keepdims=True)
    var = jnp.mean((h - mean) ** 2, axis=-1, keepdims=True)
    normed = (h - mean) / jnp.sqrt(var + LN_EPS)
    return normed * params["gamma"] + params["beta"]


if __name__ == "__main__":
    # Small shapes consistent with the module (defaults are in_dim=1024, embed_dim=768;
    # embed_dim kept a multiple of 128 so output stores are lane-dense, as in production).
    B, S, IN_DIM, EMBED_DIM = 2, 8, 256, 128

    key = jax.random.PRNGKey(0)
    k_x, k_p = jax.random.split(key)
    x = jax.random.normal(k_x, (B, S, IN_DIM), dtype=jnp.float32)
    params = init_params(k_p, IN_DIM, EMBED_DIM)

    # prep_batch-style dict; inputs_embeds aliases inputs.
    batch = {"inputs": x, "inputs_embeds": x}

    ref = _reference(x, params)

    # f32 path (exact module semantics).
    out = base_embedder_forward(batch, params, IN_DIM, EMBED_DIM)
    out = jax.block_until_ready(out)
    assert out.shape == (B, S, EMBED_DIM)
    assert jnp.allclose(out, ref, atol=1e-3, rtol=1e-3), "f32 kernel mismatch vs reference"

    # bf16-storage path (v6e/v7x bandwidth optimization; f32 accumulation + f32 LN math).
    out_bf16 = base_embedder_forward(batch, params, IN_DIM, EMBED_DIM, use_bf16=True)
    out_bf16 = jax.block_until_ready(out_bf16)
    assert out_bf16.shape == (B, S, EMBED_DIM)
    assert jnp.allclose(out_bf16, ref, atol=8e-2, rtol=8e-2), "bf16 kernel mismatch vs reference"

    print("KERNEL_OK")
</pallas_src>

<mosaic_0001>
module attributes {stable_mosaic.version = 11 : i64} {
  func.func @_embed_kernel(%arg0: i32, %arg1: memref<32x256xf32, #tpu.memory_space<vmem>>, %arg2: memref<256x128xf32, #tpu.memory_space<vmem>>, %arg3: memref<3x128xf32, #tpu.memory_space<vmem>>, %arg4: memref<32x128xf32, #tpu.memory_space<vmem>>) attributes {dimension_semantics = [#tpu.dimension_semantics<parallel>], iteration_bounds = array<i64: 1>, scalar_prefetch = 0 : i64, scratch_operands = 0 : i64, tpu.core_type = #tpu.core_type<tc>, window_params = [{transform_indices = @transform_0, window_bounds = array<i64: 32, 256>}, {pipeline_mode = #tpu.pipeline_mode<synchronous>, transform_indices = @transform_1, window_bounds = array<i64: 256, 128>}, {pipeline_mode = #tpu.pipeline_mode<synchronous>, transform_indices = @transform_2, window_bounds = array<i64: 3, 128>}, {transform_indices = @transform_3, window_bounds = array<i64: 32, 128>}]} {
    %c0 = arith.constant 0 : index
    %c0_0 = arith.constant 0 : index
    %0 = vector.load %arg1[%c0, %c0_0] : memref<32x256xf32, #tpu.memory_space<vmem>>, vector<32x256xf32>
    %c0_1 = arith.constant 0 : index
    %c0_2 = arith.constant 0 : index
    %1 = vector.load %arg2[%c0_1, %c0_2] : memref<256x128xf32, #tpu.memory_space<vmem>>, vector<256x128xf32>
    %cst = arith.constant dense<0.000000e+00> : vector<32x128xf32>
    %2 = tpu.matmul %0, %1, %cst {dimension_numbers = #tpu.dot_dimension_numbers<[1], [0], [0], [1], [0, 0, 1, 1], [], []>} : vector<32x256xf32>, vector<256x128xf32>, vector<32x128xf32> -> vector<32x128xf32>
    %c0_3 = arith.constant 0 : index
    %c0_4 = arith.constant 0 : index
    %3 = vector.load %arg3[%c0_3, %c0_4] : memref<3x128xf32, #tpu.memory_space<vmem>>, vector<3x128xf32>
    %4 = vector.extract_strided_slice %3 {offsets = [0, 0], sizes = [1, 128], strides = [1, 1]} : vector<3x128xf32> to vector<1x128xf32>
    %5 = vector.broadcast %4 : vector<1x128xf32> to vector<32x128xf32>
    %6 = arith.addf %2, %5 : vector<32x128xf32>
    %cst_5 = arith.constant dense<0.000000e+00> : vector<32xf32>
    %7 = vector.multi_reduction <add>, %6, %cst_5 [1] : vector<32x128xf32> to vector<32xf32>
    %8 = vector.shape_cast %7 : vector<32xf32> to vector<32x1xf32>
    %cst_6 = arith.constant 1.280000e+02 : f32
    %9 = vector.broadcast %cst_6 : f32 to vector<32x1xf32>
    %10 = arith.divf %8, %9 : vector<32x1xf32>
    %11 = vector.broadcast %10 : vector<32x1xf32> to vector<32x128xf32>
    %12 = arith.subf %6, %11 : vector<32x128xf32>
    %13 = arith.mulf %12, %12 : vector<32x128xf32>
    %cst_7 = arith.constant dense<0.000000e+00> : vector<32xf32>
    %14 = vector.multi_reduction <add>, %13, %cst_7 [1] : vector<32x128xf32> to vector<32xf32>
    %15 = vector.shape_cast %14 : vector<32xf32> to vector<32x1xf32>
    %cst_8 = arith.constant 1.280000e+02 : f32
    %16 = vector.broadcast %cst_8 : f32 to vector<32x1xf32>
    %17 = arith.divf %15, %16 : vector<32x1xf32>
    %cst_9 = arith.constant 9.99999974E-6 : f32
    %18 = vector.broadcast %cst_9 : f32 to vector<32x1xf32>
    %19 = arith.addf %17, %18 : vector<32x1xf32>
    %20 = math.rsqrt %19 : vector<32x1xf32>
    %21 = vector.broadcast %20 : vector<32x1xf32> to vector<32x128xf32>
    %22 = arith.mulf %12, %21 : vector<32x128xf32>
    %23 = vector.extract_strided_slice %3 {offsets = [1, 0], sizes = [1, 128], strides = [1, 1]} : vector<3x128xf32> to vector<1x128xf32>
    %24 = vector.broadcast %23 : vector<1x128xf32> to vector<32x128xf32>
    %25 = arith.mulf %22, %24 : vector<32x128xf32>
    %26 = vector.extract_strided_slice %3 {offsets = [2, 0], sizes = [1, 128], strides = [1, 1]} : vector<3x128xf32> to vector<1x128xf32>
    %27 = vector.broadcast %26 : vector<1x128xf32> to vector<32x128xf32>
    %28 = arith.addf %25, %27 : vector<32x128xf32>
    %c0_10 = arith.constant 0 : index
    %c0_11 = arith.constant 0 : index
    %29 = vector.load %arg4[%c0_10, %c0_11] : memref<32x128xf32, #tpu.memory_space<vmem>>, vector<32x128xf32>
    tpu.vector_store %arg4[%c0_10, %c0_11], %28 {strides = array<i32>} : memref<32x128xf32, #tpu.memory_space<vmem>>, vector<32x128xf32>,
    return
  }
  func.func @transform_0(%arg0: i32) -> (i32, i32) {
    %c0_i32 = arith.constant 0 : i32
    %c0_i32_0 = arith.constant 0 : i32
    return %arg0, %c0_i32 : i32, i32
  }
  func.func @transform_1(%arg0: i32) -> (i32, i32) {
    %c0_i32 = arith.constant 0 : i32
    %c0_i32_0 = arith.constant 0 : i32
    %c0_i32_1 = arith.constant 0 : i32
    return %c0_i32, %c0_i32_0 : i32, i32
  }
  func.func @transform_2(%arg0: i32) -> (i32, i32) {
    %c0_i32 = arith.constant 0 : i32
    %c0_i32_0 = arith.constant 0 : i32
    %c0_i32_1 = arith.constant 0 : i32
    return %c0_i32, %c0_i32_0 : i32, i32
  }
  func.func @transform_3(%arg0: i32) -> (i32, i32) {
    %c0_i32 = arith.constant 0 : i32
    %c0_i32_0 = arith.constant 0 : i32
    return %arg0, %c0_i32 : i32, i32
  }
}

</mosaic_0001>

<llo_original>
// kernel: embed_model_forward.1
$region0: #{embed_model_forward.1}
  #allocation0 [shape = 'u32[]', space=smem, size = 0x4, offset = 0x4, fixed_abs, tag = 'smem constant byte address 0x4 - core index']
  #allocation1 [shape = 'u32[144,128]{1,0:T(1,128)}', space=vmem, size = 0x12000, scoped, tag = 'internal scratch']
  %s0 = inlined_call_operand.vmem [shape: f32[32,256], index: 0, kind: input, shape index: {}]
  %s1 = inlined_call_operand.hbm [shape: f32[256,128], index: 1, kind: input, shape index: {}]
  %s2 = inlined_call_operand.vmem [shape: f32[3,128], index: 2, kind: input, shape index: {}]
  %s3 = inlined_call_operand.vmem [shape: f32[32,128], index: 3, kind: output, shape index: {}]
  %s4 = sld [smem:[#allocation0]]
  $region26: #{embed_model_forward.1} parent=0
    _
  %s6 = ssub.s32 1, %s4
  %s7 = scalar_select 0, %s6, %s4
  $region1: #{embed_model_forward.1} parent=0
    #allocation2 [shape = 'u8[131072]{0}', space=vmem, size = 0x20000, scoped, tag = 'input window, operand 1, single buffered']
    #allocation3 [shape = 's32[1]{0}', space=sflag, size = 0x4, scoped, tag = 'scoped memory for embed_model_forward.1']
    %8 = vsyncpa [#allocation3], 0
    // Predicated region
    $region2: #{embed_model_forward.1} parent=1 // pred_check
      _
    $region3: #{embed_model_forward.1} parent=1 // pred_check_branch
      %10 = sbr.rel (0) target = $region5
    $region4: #{embed_model_forward.1} parent=1 // pred_region
      _
    $region5: #{embed_model_forward.1} parent=1 // pred_fallthru
      _
    // Predicated region
    $region6: #{embed_model_forward.1} parent=1 // pred_check
      _
    $region7: #{embed_model_forward.1} parent=1 // pred_check_branch
      %12 = sbr.rel (0) target = $region9
    $region8: #{embed_model_forward.1} parent=1 // pred_region
      %s14 = ssub.s32 4096, 4096
      %15 = vsyncadd [#allocation3], %s14
      %s16 = sshll.u32 [#allocation2], 4
      %s17 = int_to_ptr.vmem [resolvable:$true] %s16
      %22 = dma.hbm_to_vmem [thread:$0]  %s1, 4096, %s17, [#allocation3], 128, 128, 8
    $region9: #{embed_model_forward.1} parent=1 // pred_fallthru
      _
    // Predicated region
    $region10: #{embed_model_forward.1} parent=1 // pred_check
      _
    $region11: #{embed_model_forward.1} parent=1 // pred_check_branch
      %24 = sbr.rel (0) target = $region13
    $region12: #{embed_model_forward.1} parent=1 // pred_region
      _
    $region13: #{embed_model_forward.1} parent=1 // pred_fallthru
      _
    // Predicated region
    $region14: #{embed_model_forward.1} parent=1 // pred_check
      _
    $region15: #{embed_model_forward.1} parent=1 // pred_check_branch
      %26 = sbr.rel (0) target = $region17
    $region16: #{embed_model_forward.1} parent=1 // pred_region
      %27 = dma.done [#allocation3], 4096
    $region17: #{embed_model_forward.1} parent=1 // pred_fallthru
      _
    %v28 = vld [vmem:[%s0] sm:$0xff]
    %v29 = vld [vmem:[%s0 + $0x8] sm:$0xff]
    %v30 = vld [vmem:[%s0 + $0x10] sm:$0xff]
    %v31 = vld [vmem:[%s0 + $0x18] sm:$0xff]
    %v32 = vld [vmem:[%s0 + $0x20] sm:$0xff]
    %v33 = vld [vmem:[%s0 + $0x28] sm:$0xff]
    %v34 = vld [vmem:[%s0 + $0x30] sm:$0xff]
    %v35 = vld [vmem:[%s0 + $0x38] sm:$0xff]
    %v36 = vld [vmem:[#allocation2] sm:$0xff]
    %v37 = vld [vmem:[#allocation2 + $0x8] sm:$0xff]
    %v38 = vld [vmem:[#allocation2 + $0x10] sm:$0xff]
    %v39 = vld [vmem:[#allocation2 + $0x18] sm:$0xff]
    %v40 = vld [vmem:[#allocation2 + $0x20] sm:$0xff]
    %v41 = vld [vmem:[#allocation2 + $0x28] sm:$0xff]
    %v42 = vld [vmem:[#allocation2 + $0x30] sm:$0xff]
    %v43 = vld [vmem:[#allocation2 + $0x38] sm:$0xff]
    %v44 = vld [vmem:[#allocation2 + $0x40] sm:$0xff]
    %v45 = vld [vmem:[#allocation2 + $0x48] sm:$0xff]
    %v46 = vld [vmem:[#allocation2 + $0x50] sm:$0xff]
    %v47 = vld [vmem:[#allocation2 + $0x58] sm:$0xff]
    %v48 = vld [vmem:[#allocation2 + $0x60] sm:$0xff]
    %v49 = vld [vmem:[#allocation2 + $0x68] sm:$0xff]
    %v50 = vld [vmem:[#allocation2 + $0x70] sm:$0xff]
    %v51 = vld [vmem:[#allocation2 + $0x78] sm:$0xff]
    %v52 = vld [vmem:[#allocation2 + $0x80] sm:$0xff]
    %v53 = vld [vmem:[#allocation2 + $0x88] sm:$0xff]
    %v54 = vld [vmem:[#allocation2 + $0x90] sm:$0xff]
    %v55 = vld [vmem:[#allocation2 + $0x98] sm:$0xff]
    %v56 = vld [vmem:[#allocation2 + $0xa0] sm:$0xff]
    %v57 = vld [vmem:[#allocation2 + $0xa8] sm:$0xff]
    %v58 = vld [vmem:[#allocation2 + $0xb0] sm:$0xff]
    %v59 = vld [vmem:[#allocation2 + $0xb8] sm:$0xff]
    %v60 = vld [vmem:[#allocation2 + $0xc0] sm:$0xff]
    %v61 = vld [vmem:[#allocation2 + $0xc8] sm:$0xff]
    %v62 = vld [vmem:[#allocation2 + $0xd0] sm:$0xff]
    %v63 = vld [vmem:[#allocation2 + $0xd8] sm:$0xff]
    %v64 = vld [vmem:[#allocation2 + $0xe0] sm:$0xff]
    %v65 = vld [vmem:[#allocation2 + $0xe8] sm:$0xff]
    %v66 = vld [vmem:[#allocation2 + $0xf0] sm:$0xff]
    %v67 = vld [vmem:[#allocation2 + $0xf8] sm:$0xff]
    %v68 = vld [vmem:[%s2] sm:$0x7]
    %v69 = vlaneseq
    %v70 = vshrl.u32 %v69, 7
    %v71 = vsub.s32 0, %v70
    %v72 = vrot.slane %v68, %v71
    %73 = vmatprep.subr.mxu0 0.0
    %74 = vmatpush1.msra.mxu0 %v51
    %75 = vmatprep.subr.mxu0 0.0
    %76 = vmatpush1.msra.mxu0 %v50
    %77 = vmatprep.subr.mxu0 0.0
    %78 = vmatpush1.msra.mxu0 %v49
    %79 = vmatprep.subr.mxu0 0.0
    %80 = vmatpush1.msra.mxu0 %v48
    %81 = vmatprep.subr.mxu0 0.0
    %82 = vmatpush1.msra.mxu0 %v47
    %83 = vmatprep.subr.mxu0 0.0
    %84 = vmatpush1.msra.mxu0 %v46
    %85 = vmatprep.subr.mxu0 0.0
    %86 = vmatpush1.msra.mxu0 %v45
    %87 = vmatprep.subr.mxu0 0.0
    %88 = vmatpush1.msra.mxu0 %v44
    %89 = vmatprep.subr.mxu0 0.0
    %90 = vmatpush1.msra.mxu0 %v43
    %91 = vmatprep.subr.mxu0 0.0
    %92 = vmatpush1.msra.mxu0 %v42
    %93 = vmatprep.subr.mxu0 0.0
    %94 = vmatpush1.msra.mxu0 %v41
    %95 = vmatprep.subr.mxu0 0.0
    %96 = vmatpush1.msra.mxu0 %v40
    %97 = vmatprep.subr.mxu0 0.0
    %98 = vmatpush1.msra.mxu0 %v39
    %99 = vmatprep.subr.mxu0 0.0
    %100 = vmatpush1.msra.mxu0 %v38
    %101 = vmatprep.subr.mxu0 0.0
    %102 = vmatpush1.msra.mxu0 %v37
    %103 = vmatprep.subr.mxu0 0.0
    %104 = vmatpush1.msra.mxu0 %v36
    %105 = vmatprep.subr.mxu0 0.0
    %106 = vmatpush2.msra.mxu0 %v67
    %107 = vmatprep.subr.mxu0 0.0
    %108 = vmatpush2.msra.mxu0 %v66
    %109 = vmatprep.subr.mxu0 0.0
    %110 = vmatpush2.msra.mxu0 %v65
    %111 = vmatprep.subr.mxu0 0.0
    %112 = vmatpush2.msra.mxu0 %v64
    %113 = vmatprep.subr.mxu0 0.0
    %114 = vmatpush2.msra.mxu0 %v63
    %115 = vmatprep.subr.mxu0 0.0
    %116 = vmatpush2.msra.mxu0 %v62
    %117 = vmatprep.subr.mxu0 0.0
    %118 = vmatpush2.msra.mxu0 %v61
    %119 = vmatprep.subr.mxu0 0.0
    %120 = vmatpush2.msra.mxu0 %v60
    %121 = vmatprep.subr.mxu0 0.0
    %122 = vmatpush2.msra.mxu0 %v59
    %123 = vmatprep.subr.mxu0 0.0
    %124 = vmatpush2.msra.mxu0 %v58
    %125 = vmatprep.subr.mxu0 0.0
    %126 = vmatpush2.msra.mxu0 %v57
    %127 = vmatprep.subr.mxu0 0.0
    %128 = vmatpush2.msra.mxu0 %v56
    %129 = vmatprep.subr.mxu0 0.0
    %130 = vmatpush2.msra.mxu0 %v55
    %131 = vmatprep.subr.mxu0 0.0
    %132 = vmatpush2.msra.mxu0 %v54
    %133 = vmatprep.subr.mxu0 0.0
    %134 = vmatpush2.msra.mxu0 %v53
    %135 = vmatprep.subr.mxu0 0.0
    %136 = vmatpush2.msra.mxu0 %v52
    %137 = vmatprep.mubr.f32.mxu0 %v29
    %138 = vmatmul.mubr.f32.gmra.mxu0 %v28
    %v139 = vpop.f32.mrf.mxu0
    %v140 = vadd.f32 %v72, %v139
    %v141 = vpop.f32.mrf.mxu0
    %142 = vmatprep.mubr.f32.mxu0 %v31
    %143 = vmatmul.mubr.f32.gmra.mxu0 %v30
    %v144 = vpop.f32.mrf.mxu0
    %v145 = vadd.f32 %v72, %v144
    %v146 = vpop.f32.mrf.mxu0
    %147 = vmatprep.mubr.f32.mxu0 %v33
    %148 = vmatmul.mubr.f32.gmra.mxu0 %v32
    %v149 = vpop.f32.mrf.mxu0
    %v150 = vadd.f32 %v72, %v149
    %v151 = vpop.f32.mrf.mxu0
    %152 = vmatprep.mubr.f32.mxu0 %v35
    %153 = vmatmul.mubr.f32.gmra.mxu0 %v34
    %v154 = vpop.f32.mrf.mxu0
    %v155 = vadd.f32 %v72, %v154
    %v156 = vpop.f32.mrf.mxu0
    %157 = vdwg.mxu0
    %158 = vadd.xlane.f32.xlu0 %v140
    %v159 = vpop.xlane.xlu0 %158
    %160 = vadd.xlane.f32.xlu0 %v145
    %v161 = vpop.xlane.xlu0 %160
    %162 = vadd.xlane.f32.xlu0 %v150
    %v163 = vpop.xlane.xlu0 %162
    %164 = vadd.xlane.f32.xlu0 %v155
    %v165 = vpop.xlane.xlu0 %164
    %v166 = vrcp.pop 128.0
    %v167 = vmul.f32 %v159, %v166
    %v168 = vmul.f32 %v161, %v166
    %v169 = vmul.f32 %v163, %v166
    %v170 = vmul.f32 %v165, %v166
    %v171 = vsub.f32 %v140, %v167
    %v172 = vsub.f32 %v145, %v168
    %v173 = vsub.f32 %v150, %v169
    %v174 = vsub.f32 %v155, %v170
    %v175 = vmul.f32 %v171, %v171
    %v176 = vmul.f32 %v172, %v172
    %v177 = vmul.f32 %v173, %v173
    %v178 = vmul.f32 %v174, %v174
    %179 = vadd.xlane.f32.xlu0 %v175
    %v180 = vpop.xlane.xlu0 %179
    %181 = vadd.xlane.f32.xlu0 %v176
    %v182 = vpop.xlane.xlu0 %181
    %183 = vadd.xlane.f32.xlu0 %v177
    %v184 = vpop.xlane.xlu0 %183
    %185 = vadd.xlane.f32.xlu0 %v178
    %v186 = vpop.xlane.xlu0 %185
    %v187 = vmul.f32 %v180, %v166
    %v188 = vmul.f32 %v182, %v166
    %v189 = vmul.f32 %v184, %v166
    %v190 = vmul.f32 %v186, %v166
    %v191 = vadd.f32 %v187, 1e-05
    %v192 = vadd.f32 %v188, 1e-05
    %v193 = vadd.f32 %v189, 1e-05
    %v194 = vadd.f32 %v190, 1e-05
    %v195 = vrsqrt.pop %v191
    %v196 = vrsqrt.pop %v192
    %v197 = vrsqrt.pop %v193
    %v198 = vrsqrt.pop %v194
    %v199 = vmul.f32 %v171, %v195
    %v200 = vmul.f32 %v172, %v196
    %v201 = vmul.f32 %v173, %v197
    %v202 = vmul.f32 %v174, %v198
    %v203 = vlaneseq
    %v204 = vshrl.u32 %v203, 7
    %v205 = vsub.s32 1, %v204
    %v206 = vrot.slane %v68, %v205
    %v207 = vmul.f32 %v199, %v206
    %v208 = vmul.f32 %v200, %v206
    %v209 = vmul.f32 %v201, %v206
    %v210 = vmul.f32 %v202, %v206
    %v211 = vlaneseq
    %v212 = vshrl.u32 %v211, 7
    %v213 = vsub.s32 2, %v212
    %v214 = vrot.slane %v68, %v213
    %v215 = vadd.f32 %v207, %v214
    %v216 = vadd.f32 %v208, %v214
    %v217 = vadd.f32 %v209, %v214
    %v218 = vadd.f32 %v210, %v214
    %219 = vst [vmem:[%s3] sm:$0xff] %v215
    %220 = vst [vmem:[%s3 + $0x8] sm:$0xff] %v216
    %221 = vst [vmem:[%s3 + $0x10] sm:$0xff] %v217
    %222 = vst [vmem:[%s3 + $0x18] sm:$0xff] %v218
    // Predicated region
    $region18: #{embed_model_forward.1} parent=1 // pred_check
      _
    $region19: #{embed_model_forward.1} parent=1 // pred_check_branch
      %224 = sbr.rel (0) target = $region21
    $region20: #{embed_model_forward.1} parent=1 // pred_region
      _
    $region21: #{embed_model_forward.1} parent=1 // pred_fallthru
      _
    // Predicated region
    $region22: #{embed_model_forward.1} parent=1 // pred_check
      _
    $region23: #{embed_model_forward.1} parent=1 // pred_check_branch
      %226 = sbr.rel (0) target = $region25
    $region24: #{embed_model_forward.1} parent=1 // pred_region
      _
    $region25: #{embed_model_forward.1} parent=1 // pred_fallthru
      _
    %227 = vsyncpa [#allocation3], 1

</llo_original>
